<compile_context>
chip_gen: v7x
topology: tpu7x:2x2x1
jax: 0.10.0
libtpu: 0.0.40
codegen_flags: <defaults>
</compile_context>

<pallas_src>
import functools

import jax
import jax.numpy as jnp
from jax.experimental import pallas as pl
from jax.experimental.pallas import tpu as pltpu


def _le_1_kernel(x_ref, c_ref, m_ref, j_out, m_out, le_out, *, three_dt, inv_2t):
    dim = c_ref.shape[0]
    BB = x_ref.shape[0]
    lanes = m_ref.shape[1]              # == BB * dim

    C = c_ref[...]                      # (dim, dim)     batch-invariant (hoisted)
    M2 = m_ref[...]                     # (dim, BB*dim)  packed tangent matrices
    x = x_ref[...]                      # (BB, dim)
    xsq = three_dt * x * x              # 3*dt*x^2       (BB, dim)

    # ---- one MXU matmul against all BB tangent matrices at once --------------
    CM = jnp.dot(C, M2, preferred_element_type=jnp.float32)      # (dim, BB*dim)

    # ---- expand the per-(batch,row) diagonal scale to the packed lane layout -
    # S[i, b*dim + k] = 3*dt*x[b, i]^2, built via a tiny one-hot matmul (MXU),
    # no lane gather / integer div needed.  onehot[b, c] = 1 iff lane c is in
    # batch-block b, i.e. b*dim <= c < (b+1)*dim.
    c_idx = jax.lax.broadcasted_iota(jnp.int32, (BB, lanes), 1)
    lo = jax.lax.broadcasted_iota(jnp.int32, (BB, lanes), 0) * dim
    onehot = ((c_idx >= lo) & (c_idx < lo + dim)).astype(jnp.float32)  # (BB, lanes)
    S = jax.lax.dot_general(
        xsq, onehot,
        dimension_numbers=(((0,), (0,)), ((), ())),
        preferred_element_type=jnp.float32)                       # (dim, lanes)

    # ---- tangent propagation: M_new = J @ M = C@M - 3dt*diag(x^2)@M ----------
    M_new = CM - S * M2
    m_out[...] = M_new

    # ---- jacobian output: J = C (tiled over the batch lanes) - diag term -----
    r = jax.lax.broadcasted_iota(jnp.int32, (dim, dim), 0)
    c2 = jax.lax.broadcasted_iota(jnp.int32, (dim, dim), 1)
    eye = (r == c2).astype(jnp.float32)
    j_out[...] = jnp.tile(C, (1, BB)) - jnp.tile(eye, (1, BB)) * S

    # ---- lya_expo: LE_i = log(||column_i(M_new)||) / t_le ---------------------
    # log runs on the EUP, the column reduce on the XLU: both off the VALU path.
    colsq = jnp.sum(M_new * M_new, axis=0, keepdims=True)         # (1, BB*dim)
    le_out[...] = inv_2t * jnp.log(jnp.maximum(colsq, 1e-37))     # guard log(0)


def _choose_batch_block(B, dim, slab_budget_bytes=2 << 20):
    """Pick the batch block BB.

    Constraints: B % BB == 0; the packed block (dim, BB*dim) is (8,128)-legal
    (lane width multiple of 128 unless BB == B); the x block (BB, dim) is
    sublane-legal (BB % 8 == 0 unless BB == B); one (dim, BB*dim) f32 slab
    stays under `slab_budget_bytes` so 3 double-buffered slabs fit scoped VMEM
    on every TPU generation; and, if possible, keep >= 2 grid steps so both
    v7x TensorCores get work.
    """
    divisors = [bb for bb in range(1, B + 1) if B % bb == 0]
    legal = [bb for bb in divisors
             if bb == B or ((bb * dim) % 128 == 0 and bb % 8 == 0)]
    if not legal:
        return B
    fitting = [bb for bb in legal if 4 * dim * bb * dim <= slab_budget_bytes]
    pool = fitting if fitting else [min(legal)]
    multi_step = [bb for bb in pool if B // bb >= 2]
    return max(multi_step) if multi_step else max(pool)


def le_1_step(x, A, M, *, delta_t, t_le, batch_block=None):
    """x: (B, dim) f32, A: (dim, dim) f32, M: (B, dim, dim) f32.

    Returns (J, M_new, LE) with J, M_new: (B, dim, dim), LE: (B, dim).
    """
    B, dim = x.shape
    assert A.shape == (dim, dim) and M.shape == (B, dim, dim)
    BB = batch_block if batch_block is not None else _choose_batch_block(B, dim)
    assert B % BB == 0

    # Hoisted batch-invariant work: C = I + dt*A computed once, outside the grid.
    C = jnp.eye(dim, dtype=jnp.float32) + jnp.float32(delta_t) * A.astype(jnp.float32)
    # Lane-dense packing (layout plumbing): M2[j, b*dim + k] = M[b, j, k].
    M2 = jnp.transpose(M.astype(jnp.float32), (1, 0, 2)).reshape(dim, B * dim)

    kernel = functools.partial(_le_1_kernel,
                               three_dt=3.0 * float(delta_t),
                               inv_2t=0.5 / float(t_le))

    J2, Mn2, LE2 = pl.pallas_call(
        kernel,
        out_shape=(
            jax.ShapeDtypeStruct((dim, B * dim), jnp.float32),   # J  (packed)
            jax.ShapeDtypeStruct((dim, B * dim), jnp.float32),   # M_new (packed)
            jax.ShapeDtypeStruct((1, B * dim), jnp.float32),     # LE (lane-dense)
        ),
        grid=(B // BB,),
        in_specs=[
            pl.BlockSpec((BB, dim), lambda b: (b, 0)),           # x
            pl.BlockSpec((dim, dim), lambda b: (0, 0)),          # C (shared)
            pl.BlockSpec((dim, BB * dim), lambda b: (0, b)),     # M packed
        ],
        out_specs=(
            pl.BlockSpec((dim, BB * dim), lambda b: (0, b)),
            pl.BlockSpec((dim, BB * dim), lambda b: (0, b)),
            pl.BlockSpec((1, BB * dim), lambda b: (0, b)),
        ),
        compiler_params=pltpu.CompilerParams(
            dimension_semantics=("parallel",)),
        cost_estimate=pl.CostEstimate(
            flops=2 * B * dim * dim * dim,
            transcendentals=B * dim,
            bytes_accessed=4 * (3 * B * dim * dim + 2 * B * dim + dim * dim)),
    )(x.astype(jnp.float32), C, M2)

    # Unpack back to the batch-major layout.
    J = J2.reshape(dim, B, dim).transpose(1, 0, 2)
    M_new = Mn2.reshape(dim, B, dim).transpose(1, 0, 2)
    LE = LE2.reshape(B, dim)
    return J, M_new, LE


class LE1:
    """JAX mirror of the PyTorch LE_1 module (mutates the std_input list)."""

    def __init__(self, A, delta_t, t_le):
        self.A = A
        self.delta_t = float(delta_t)
        self.t_le = float(t_le)

    def forward(self, std_input):
        x = std_input[0]
        M = std_input[4]
        J, M_new, LE = le_1_step(x, self.A, M,
                                 delta_t=self.delta_t, t_le=self.t_le)
        std_input[7] = J       # jacobian(std_input)
        std_input[5] = LE      # lya_expo(std_input)
        # lya_expo internally propagates the tangent basis M <- J @ M; surface
        # it in slot 4 so subsequent time steps can reuse it.
        std_input[4] = M_new
        return std_input


def _reference(x, A, M, delta_t, t_le):
    dim = A.shape[0]
    eye = jnp.eye(dim, dtype=jnp.float32)
    J = eye[None] + delta_t * A[None] - 3.0 * delta_t * (eye[None] * (x[:, None, :] ** 2))
    M_new = jnp.einsum("bij,bjk->bik", J, M)
    LE = 0.5 * jnp.log(jnp.sum(M_new * M_new, axis=1)) / t_le
    return J, M_new, LE


if __name__ == "__main__":
    B, dim = 32, 8
    delta_t, t_le = 0.01, 1.0

    key = jax.random.PRNGKey(0)
    kx, ka, km = jax.random.split(key, 3)
    x = jax.random.normal(kx, (B, dim), dtype=jnp.float32)
    A = jax.random.normal(ka, (dim, dim), dtype=jnp.float32)
    M0 = (jnp.eye(dim, dtype=jnp.float32)[None]
          + 0.1 * jax.random.normal(km, (B, dim, dim), dtype=jnp.float32))

    # std_input mirrors the PyTorch list-of-tensors convention.
    std_input = [x, None, None, None, M0, None, None, None]

    module = LE1(A, delta_t, t_le)
    module.forward(std_input)
    jax.block_until_ready((std_input[7], std_input[5], std_input[4]))

    J_ref, M_ref, LE_ref = _reference(x, A, M0, delta_t, t_le)
    assert jnp.allclose(std_input[7], J_ref, atol=1e-4, rtol=1e-4)
    assert jnp.allclose(std_input[4], M_ref, atol=1e-4, rtol=1e-4)
    assert jnp.allclose(std_input[5], LE_ref, atol=1e-4, rtol=1e-4)

    print("KERNEL_OK")
</pallas_src>

<mosaic_0001>
module attributes {stable_mosaic.version = 11 : i64} {
  func.func @_le_1_kernel(%arg0: i32, %arg1: memref<16x8xf32, #tpu.memory_space<vmem>>, %arg2: memref<8x8xf32, #tpu.memory_space<vmem>>, %arg3: memref<8x128xf32, #tpu.memory_space<vmem>>, %arg4: memref<8x128xf32, #tpu.memory_space<vmem>>, %arg5: memref<8x128xf32, #tpu.memory_space<vmem>>, %arg6: memref<1x128xf32, #tpu.memory_space<vmem>>) attributes {dimension_semantics = [#tpu.dimension_semantics<parallel>], iteration_bounds = array<i64: 2>, scalar_prefetch = 0 : i64, scratch_operands = 0 : i64, tpu.core_type = #tpu.core_type<tc>, window_params = [{transform_indices = @transform_0, window_bounds = array<i64: 16, 8>}, {pipeline_mode = #tpu.pipeline_mode<synchronous>, transform_indices = @transform_1, window_bounds = array<i64: 8, 8>}, {transform_indices = @transform_2, window_bounds = array<i64: 8, 128>}, {transform_indices = @transform_3, window_bounds = array<i64: 8, 128>}, {transform_indices = @transform_4, window_bounds = array<i64: 8, 128>}, {transform_indices = @transform_5, window_bounds = array<i64: 1, 128>}]} {
    %c0 = arith.constant 0 : index
    %c0_0 = arith.constant 0 : index
    %0 = vector.load %arg2[%c0, %c0_0] : memref<8x8xf32, #tpu.memory_space<vmem>>, vector<8x8xf32>
    %c0_1 = arith.constant 0 : index
    %c0_2 = arith.constant 0 : index
    %1 = vector.load %arg3[%c0_1, %c0_2] : memref<8x128xf32, #tpu.memory_space<vmem>>, vector<8x128xf32>
    %c0_3 = arith.constant 0 : index
    %c0_4 = arith.constant 0 : index
    %2 = vector.load %arg1[%c0_3, %c0_4] : memref<16x8xf32, #tpu.memory_space<vmem>>, vector<16x8xf32>
    %cst = arith.constant 3.000000e-02 : f32
    %3 = vector.broadcast %cst : f32 to vector<16x8xf32>
    %4 = arith.mulf %3, %2 : vector<16x8xf32>
    %5 = arith.mulf %4, %2 : vector<16x8xf32>
    %cst_5 = arith.constant dense<0.000000e+00> : vector<8x128xf32>
    %6 = tpu.matmul %0, %1, %cst_5 {dimension_numbers = #tpu.dot_dimension_numbers<[1], [0], [0], [1], [0, 0, 1, 1], [], []>} : vector<8x8xf32>, vector<8x128xf32>, vector<8x128xf32> -> vector<8x128xf32>
    %7 = tpu.iota {dimensions = array<i32: 1>} : vector<16x128xi32>
    %8 = tpu.iota {dimensions = array<i32: 0>} : vector<16x128xi32>
    %c8_i32 = arith.constant 8 : i32
    %9 = vector.broadcast %c8_i32 : i32 to vector<16x128xi32>
    %10 = arith.muli %8, %9 : vector<16x128xi32>
    %11 = arith.cmpi sge, %7, %10 : vector<16x128xi32>
    %c8_i32_6 = arith.constant 8 : i32
    %12 = vector.broadcast %c8_i32_6 : i32 to vector<16x128xi32>
    %13 = arith.addi %10, %12 : vector<16x128xi32>
    %14 = arith.cmpi slt, %7, %13 : vector<16x128xi32>
    %15 = arith.andi %11, %14 : vector<16x128xi1>
    %16 = arith.extui %15 : vector<16x128xi1> to vector<16x128xi32>
    %17 = arith.sitofp %16 : vector<16x128xi32> to vector<16x128xf32>
    %cst_7 = arith.constant dense<0.000000e+00> : vector<8x128xf32>
    %18 = tpu.matmul %5, %17, %cst_7 {dimension_numbers = #tpu.dot_dimension_numbers<[0], [0], [1], [1], [0, 1, 1, 1], [], []>} : vector<16x8xf32>, vector<16x128xf32>, vector<8x128xf32> -> vector<8x128xf32>
    %19 = arith.mulf %18, %1 : vector<8x128xf32>
    %20 = arith.subf %6, %19 : vector<8x128xf32>
    %c0_8 = arith.constant 0 : index
    %c0_9 = arith.constant 0 : index
    %21 = vector.load %arg5[%c0_8, %c0_9] : memref<8x128xf32, #tpu.memory_space<vmem>>, vector<8x128xf32>
    tpu.vector_store %arg5[%c0_8, %c0_9], %20 {strides = array<i32>} : memref<8x128xf32, #tpu.memory_space<vmem>>, vector<8x128xf32>,
    %22 = tpu.iota {dimensions = array<i32: 0>} : vector<8x8xi32>
    %23 = tpu.iota {dimensions = array<i32: 1>} : vector<8x8xi32>
    %24 = arith.cmpi eq, %22, %23 : vector<8x8xi32>
    %25 = arith.extui %24 : vector<8x8xi1> to vector<8x8xi32>
    %26 = arith.sitofp %25 : vector<8x8xi32> to vector<8x8xf32>
    %27 = tpu.concatenate %0, %0, %0, %0, %0, %0, %0, %0, %0, %0, %0, %0, %0, %0, %0, %0 in 1 : vector<8x8xf32>, vector<8x8xf32>, vector<8x8xf32>, vector<8x8xf32>, vector<8x8xf32>, vector<8x8xf32>, vector<8x8xf32>, vector<8x8xf32>, vector<8x8xf32>, vector<8x8xf32>, vector<8x8xf32>, vector<8x8xf32>, vector<8x8xf32>, vector<8x8xf32>, vector<8x8xf32>, vector<8x8xf32> -> vector<8x128xf32>
    %28 = tpu.concatenate %26, %26, %26, %26, %26, %26, %26, %26, %26, %26, %26, %26, %26, %26, %26, %26 in 1 : vector<8x8xf32>, vector<8x8xf32>, vector<8x8xf32>, vector<8x8xf32>, vector<8x8xf32>, vector<8x8xf32>, vector<8x8xf32>, vector<8x8xf32>, vector<8x8xf32>, vector<8x8xf32>, vector<8x8xf32>, vector<8x8xf32>, vector<8x8xf32>, vector<8x8xf32>, vector<8x8xf32>, vector<8x8xf32> -> vector<8x128xf32>
    %29 = arith.mulf %28, %18 : vector<8x128xf32>
    %30 = arith.subf %27, %29 : vector<8x128xf32>
    %c0_10 = arith.constant 0 : index
    %c0_11 = arith.constant 0 : index
    %31 = vector.load %arg4[%c0_10, %c0_11] : memref<8x128xf32, #tpu.memory_space<vmem>>, vector<8x128xf32>
    tpu.vector_store %arg4[%c0_10, %c0_11], %30 {strides = array<i32>} : memref<8x128xf32, #tpu.memory_space<vmem>>, vector<8x128xf32>,
    %32 = arith.mulf %20, %20 : vector<8x128xf32>
    %cst_12 = arith.constant dense<0.000000e+00> : vector<128xf32>
    %33 = vector.multi_reduction <add>, %32, %cst_12 [0] : vector<8x128xf32> to vector<128xf32>
    %34 = vector.shape_cast %33 : vector<128xf32> to vector<1x128xf32>
    %cst_13 = arith.constant 9.99999991E-38 : f32
    %35 = vector.broadcast %cst_13 : f32 to vector<1x128xf32>
    %36 = arith.maximumf %34, %35 : vector<1x128xf32>
    %37 = math.log %36 : vector<1x128xf32>
    %cst_14 = arith.constant 5.000000e-01 : f32
    %38 = vector.broadcast %cst_14 : f32 to vector<1x128xf32>
    %39 = arith.mulf %38, %37 : vector<1x128xf32>
    %c0_15 = arith.constant 0 : index
    %c0_16 = arith.constant 0 : index
    %40 = vector.load %arg6[%c0_15, %c0_16] : memref<1x128xf32, #tpu.memory_space<vmem>>, vector<1x128xf32>
    tpu.vector_store %arg6[%c0_15, %c0_16], %39 {strides = array<i32>} : memref<1x128xf32, #tpu.memory_space<vmem>>, vector<1x128xf32>,
    return
  }
  func.func @transform_0(%arg0: i32) -> (i32, i32) {
    %c0_i32 = arith.constant 0 : i32
    %c0_i32_0 = arith.constant 0 : i32
    return %arg0, %c0_i32 : i32, i32
  }
  func.func @transform_1(%arg0: i32) -> (i32, i32) {
    %c0_i32 = arith.constant 0 : i32
    %c0_i32_0 = arith.constant 0 : i32
    %c0_i32_1 = arith.constant 0 : i32
    return %c0_i32, %c0_i32_0 : i32, i32
  }
  func.func @transform_2(%arg0: i32) -> (i32, i32) {
    %c0_i32 = arith.constant 0 : i32
    %c0_i32_0 = arith.constant 0 : i32
    return %c0_i32, %arg0 : i32, i32
  }
  func.func @transform_3(%arg0: i32) -> (i32, i32) {
    %c0_i32 = arith.constant 0 : i32
    %c0_i32_0 = arith.constant 0 : i32
    return %c0_i32, %arg0 : i32, i32
  }
  func.func @transform_4(%arg0: i32) -> (i32, i32) {
    %c0_i32 = arith.constant 0 : i32
    %c0_i32_0 = arith.constant 0 : i32
    return %c0_i32, %arg0 : i32, i32
  }
  func.func @transform_5(%arg0: i32) -> (i32, i32) {
    %c0_i32 = arith.constant 0 : i32
    %c0_i32_0 = arith.constant 0 : i32
    return %c0_i32, %arg0 : i32, i32
  }
}

</mosaic_0001>

<llo_original>
// kernel: tpu_custom_call.1
$region0: #{tpu_custom_call.1}
  #allocation0 [shape = 'u32[]', space=smem, size = 0x4, offset = 0x4, fixed_abs, tag = 'smem constant byte address 0x4 - core index']
  #allocation1 [shape = 'u32[144,128]{1,0:T(1,128)}', space=vmem, size = 0x12000, scoped, tag = 'internal scratch']
  %s0 = inlined_call_operand.vmem [shape: f32[32,8], index: 0, kind: input, shape index: {}]
  %s1 = inlined_call_operand.vmem [shape: f32[8,8], index: 1, kind: input, shape index: {}]
  %s2 = inlined_call_operand.vmem [shape: f32[8,256], index: 2, kind: input, shape index: {}]
  %s3 = inlined_call_operand.hbm [shape: f32[8,256], index: 3, kind: output, shape index: {0}]
  %s4 = inlined_call_operand.hbm [shape: f32[8,256], index: 4, kind: output, shape index: {1}]
  %s5 = inlined_call_operand.hbm [shape: f32[1,256], index: 5, kind: output, shape index: {2}]
  %6 = xla_tuple %s3, %s4, %s5
  %s7 = sld [smem:[#allocation0]]
  $region61: #{tpu_custom_call.1} parent=0
    _
  %s9 = ssub.s32 1, %s7
  %s10 = scalar_select 0, %s9, %s7
  $region1: #{tpu_custom_call.1} parent=0
    #allocation2 [shape = 'u8[8192]{0}', space=vmem, size = 0x2000, scoped, tag = 'output window, operand 0']
    #allocation3 [shape = 's32[2]{0}', space=sflag, size = 0x8, scoped, tag = 'scoped memory for tpu_custom_call.1']
    #allocation4 [shape = 'u8[8192]{0}', space=vmem, size = 0x2000, scoped, tag = 'output window, operand 1']
    #allocation5 [shape = 's32[2]{0}', space=sflag, size = 0x8, scoped, tag = 'scoped memory for tpu_custom_call.1']
    #allocation6 [shape = 'u8[1024]{0}', space=vmem, size = 0x400, scoped, tag = 'output window, operand 2']
    %11 = vsyncpa [#allocation3], 0
    %s12 = scalar_lea.sflag [#allocation3], 1
    %13 = vsyncpa %s12, 0
    %14 = vsyncpa [#allocation5], 0
    %s15 = scalar_lea.sflag [#allocation5], 1
    %16 = vsyncpa %s15, 0
    loop: start=0, step=1, limit=4
    $region2: #{tpu_custom_call.1} parent=1 // loop_pre_header
      _
    $region3: #{tpu_custom_call.1} parent=1 // loop_header
      %s18 = sphi 0, %s22
      %p19 = scmp.ge.s32.totalorder %s18, 4
      %s28 = sphi 0, %s30
      %s31 = sphi 0, %s28
      %s32 = sphi 0, %s31
      %s48 = sphi 0, %s32
      %s52 = sphi 0, %s52
      %s54 = sphi 0, %s52
      %s55 = sphi 0, %s54
      %s69 = sphi 0, %s55
      %s75 = sphi 0, %s77
      %s78 = sphi 0, %s75
      %s79 = sphi 0, %s78
      %s95 = sphi 0, %s79
      %s101 = sphi 0, %s103
      %s104 = sphi 0, %s101
      %s105 = sphi 0, %s104
      %s121 = sphi 0, %s105
      %s127 = sphi 0, %s129
      %s130 = sphi 0, %s127
      %s131 = sphi 0, %s130
      %s147 = sphi 0, %s131
      %s153 = sphi 0, %s155
      %s156 = sphi 0, %s153
      %s157 = sphi 0, %s156
      %s173 = sphi 0, %s157
    $region4: #{tpu_custom_call.1} parent=1 // loop_header_branch
      %21 = sbr.rel (%p19) target = $region8
    $region5: #{tpu_custom_call.1} parent=1 // loop_body
      %s23 = ssub.s32 %s18, 1
      %s24 = ssub.s32 %s18, 2
      %s25 = sadd.s32 %s18, 1
      %s26 = ssub.s32 %s18, %s25
      %p27 = scmp.eq.s32.totalorder %s26, 0
      %s29 = sadd.s32 %s28, 1
      %s30 = scalar_select %p27, %s28, %s29
      %p33 = pneg %p27
      %p34 = scmp.eq.s32.totalorder %s18, 1
      %p35 = por %p33, %p34
      %p36 = scmp.ne.s32.totalorder %s28, %s31
      %p37 = scmp.eq.s32.totalorder %s18, 0
      %p38 = por %p36, %p37
      %p39 = scmp.ne.s32.totalorder %s28, %s31
      %p40 = scmp.eq.s32.totalorder %s23, 1
      %p41 = por %p39, %p40
      %p42 = scmp.ne.s32.totalorder %s31, %s32
      %p43 = scmp.eq.s32.totalorder %s23, 0
      %p44 = por %p42, %p43
      %p45 = scmp.ne.s32.totalorder %s31, %s32
      %p46 = scmp.eq.s32.totalorder %s24, 1
      %p47 = por %p45, %p46
      %p49 = scmp.ne.s32.totalorder %s32, %s48
      %p50 = scmp.eq.s32.totalorder %s24, 0
      %p51 = por %p49, %p50
      %s53 = sadd.s32 %s52, 1
      %p56 = scmp.eq.s32.totalorder %s18, 1
      %p57 = scmp.ne.s32.totalorder %s52, %s54
      %p58 = scmp.eq.s32.totalorder %s18, 0
      %p59 = por %p57, %p58
      %p60 = scmp.ne.s32.totalorder %s52, %s54
      %p61 = scmp.eq.s32.totalorder %s23, 1
      %p62 = por %p60, %p61
      %p63 = scmp.ne.s32.totalorder %s54, %s55
      %p64 = scmp.eq.s32.totalorder %s23, 0
      %p65 = por %p63, %p64
      %p66 = scmp.ne.s32.totalorder %s54, %s55
      %p67 = scmp.eq.s32.totalorder %s24, 1
      %p68 = por %p66, %p67
      %p70 = scmp.ne.s32.totalorder %s55, %s69
      %p71 = scmp.eq.s32.totalorder %s24, 0
      %p72 = por %p70, %p71
      %s73 = ssub.s32 %s18, %s25
      %p74 = scmp.eq.s32.totalorder %s73, 0
      %s76 = sadd.s32 %s75, 1
      %s77 = scalar_select %p74, %s75, %s76
      %p80 = pneg %p74
      %p81 = scmp.eq.s32.totalorder %s18, 1
      %p82 = por %p80, %p81
      %p83 = scmp.ne.s32.totalorder %s75, %s78
      %p84 = scmp.eq.s32.totalorder %s18, 0
      %p85 = por %p83, %p84
      %p86 = scmp.ne.s32.totalorder %s75, %s78
      %p87 = scmp.eq.s32.totalorder %s23, 1
      %p88 = por %p86, %p87
      %p89 = scmp.ne.s32.totalorder %s78, %s79
      %p90 = scmp.eq.s32.totalorder %s23, 0
      %p91 = por %p89, %p90
      %p92 = scmp.ne.s32.totalorder %s78, %s79
      %p93 = scmp.eq.s32.totalorder %s24, 1
      %p94 = por %p92, %p93
      %p96 = scmp.ne.s32.totalorder %s79, %s95
      %p97 = scmp.eq.s32.totalorder %s24, 0
      %p98 = por %p96, %p97
      %s99 = ssub.s32 %s18, %s25
      %p100 = scmp.eq.s32.totalorder %s99, 0
      %s102 = sadd.s32 %s101, 1
      %s103 = scalar_select %p100, %s101, %s102
      %p106 = pneg %p100
      %p107 = scmp.eq.s32.totalorder %s18, 1
      %p108 = por %p106, %p107
      %p109 = scmp.ne.s32.totalorder %s101, %s104
      %p110 = scmp.eq.s32.totalorder %s18, 0
      %p111 = por %p109, %p110
      %p112 = scmp.ne.s32.totalorder %s101, %s104
      %p113 = scmp.eq.s32.totalorder %s23, 1
      %p114 = por %p112, %p113
      %p115 = scmp.ne.s32.totalorder %s104, %s105
      %p116 = scmp.eq.s32.totalorder %s23, 0
      %p117 = por %p115, %p116
      %p118 = scmp.ne.s32.totalorder %s104, %s105
      %p119 = scmp.eq.s32.totalorder %s24, 1
      %p120 = por %p118, %p119
      %p122 = scmp.ne.s32.totalorder %s105, %s121
      %p123 = scmp.eq.s32.totalorder %s24, 0
      %p124 = por %p122, %p123
      %s125 = ssub.s32 %s18, %s25
      %p126 = scmp.eq.s32.totalorder %s125, 0
      %s128 = sadd.s32 %s127, 1
      %s129 = scalar_select %p126, %s127, %s128
      %p132 = pneg %p126
      %p133 = scmp.eq.s32.totalorder %s18, 1
      %p134 = por %p132, %p133
      %p135 = scmp.ne.s32.totalorder %s127, %s130
      %p136 = scmp.eq.s32.totalorder %s18, 0
      %p137 = por %p135, %p136
      %p138 = scmp.ne.s32.totalorder %s127, %s130
      %p139 = scmp.eq.s32.totalorder %s23, 1
      %p140 = por %p138, %p139
      %p141 = scmp.ne.s32.totalorder %s130, %s131
      %p142 = scmp.eq.s32.totalorder %s23, 0
      %p143 = por %p141, %p142
      %p144 = scmp.ne.s32.totalorder %s130, %s131
      %p145 = scmp.eq.s32.totalorder %s24, 1
      %p146 = por %p144, %p145
      %p148 = scmp.ne.s32.totalorder %s131, %s147
      %p149 = scmp.eq.s32.totalorder %s24, 0
      %p150 = por %p148, %p149
      %s151 = ssub.s32 %s18, %s25
      %p152 = scmp.eq.s32.totalorder %s151, 0
      %s154 = sadd.s32 %s153, 1
      %s155 = scalar_select %p152, %s153, %s154
      %p158 = pneg %p152
      %p159 = scmp.eq.s32.totalorder %s18, 1
      %p160 = por %p158, %p159
      %p161 = scmp.ne.s32.totalorder %s153, %s156
      %p162 = scmp.eq.s32.totalorder %s18, 0
      %p163 = por %p161, %p162
      %p164 = scmp.ne.s32.totalorder %s153, %s156
      %p165 = scmp.eq.s32.totalorder %s23, 1
      %p166 = por %p164, %p165
      %p167 = scmp.ne.s32.totalorder %s156, %s157
      %p168 = scmp.eq.s32.totalorder %s23, 0
      %p169 = por %p167, %p168
      %p170 = scmp.ne.s32.totalorder %s156, %s157
      %p171 = scmp.eq.s32.totalorder %s24, 1
      %p172 = por %p170, %p171
      %p174 = scmp.ne.s32.totalorder %s157, %s173
      %p175 = scmp.eq.s32.totalorder %s24, 0
      %p176 = por %p174, %p175
      %p177 = scmp.le.s32.totalorder 1, %s18
      %p178 = scmp.lt.s32.totalorder %s18, 3
      %p179 = pnand %p177, %p178
      %p180 = pneg %p179
      // Predicated region
      $region9: #{tpu_custom_call.1} parent=5 // pred_check
        _
      $region10: #{tpu_custom_call.1} parent=5 // pred_check_branch
        %182 = sbr.rel (%p179) target = $region12
      $region11: #{tpu_custom_call.1} parent=5 // pred_region
        %s183 = ssub.s32 %s18, 1
        // Predicated region
        $region13: #{tpu_custom_call.1} parent=11 // pred_check
          %p184 = pneg %p65
        $region14: #{tpu_custom_call.1} parent=11 // pred_check_branch
          %186 = sbr.rel (%p184) target = $region16
        $region15: #{tpu_custom_call.1} parent=11 // pred_region
          _
        $region16: #{tpu_custom_call.1} parent=11 // pred_fallthru
          _
      $region12: #{tpu_custom_call.1} parent=5 // pred_fallthru
        _
      %p187 = scmp.lt.s32.totalorder %s18, 2
      // Predicated region
      $region17: #{tpu_custom_call.1} parent=5 // pred_check
        %p188 = pneg %p187
      $region18: #{tpu_custom_call.1} parent=5 // pred_check_branch
        %190 = sbr.rel (%p188) target = $region20
      $region19: #{tpu_custom_call.1} parent=5 // pred_region
        // Predicated region
        $region21: #{tpu_custom_call.1} parent=19 // pred_check
          %p191 = pneg %p38
        $region22: #{tpu_custom_call.1} parent=19 // pred_check_branch
          %193 = sbr.rel (%p191) target = $region24
        $region23: #{tpu_custom_call.1} parent=19 // pred_region
          %s194 = smul.u32 2, %s18
          %p195 = scmp.lt.s32.totalorder %s194, 3
          %s196 = scalar_select %p195, %s194, 3
          %s197 = smul.addr %s196, 8
          %s198 = scalar_lea.vmem %s0, %s197
          %s199 = smul.u32 2, %s18
        $region24: #{tpu_custom_call.1} parent=19 // pred_fallthru
          _
        // Predicated region
        $region25: #{tpu_custom_call.1} parent=19 // pred_check
          %p200 = pneg %p85
        $region26: #{tpu_custom_call.1} parent=19 // pred_check_branch
          %202 = sbr.rel (%p200) target = $region28
        $region27: #{tpu_custom_call.1} parent=19 // pred_region
          %p203 = scmp.lt.s32.totalorder %s18, 1
          %s204 = scalar_select %p203, %s18, 1
          %s205 = smul.addr %s204, 8
          %s206 = scalar_lea.vmem %s2, %s205
        $region28: #{tpu_custom_call.1} parent=19 // pred_fallthru
          _
      $region20: #{tpu_custom_call.1} parent=5 // pred_fallthru
        _
      %p207 = scmp.le.s32.totalorder 1, %s18
      %p208 = scmp.lt.s32.totalorder %s18, 3
      %p209 = pnand %p207, %p208
      %p210 = pneg %p209
      // Predicated region
      $region29: #{tpu_custom_call.1} parent=5 // pred_check
        _
      $region30: #{tpu_custom_call.1} parent=5 // pred_check_branch
        %212 = sbr.rel (%p209) target = $region32
      $region31: #{tpu_custom_call.1} parent=5 // pred_region
        %s213 = ssub.s32 %s18, 1
        %s214 = smul.u32 2, %s23
        %p215 = scmp.lt.s32.totalorder %s214, 3
        %s216 = scalar_select %p215, %s214, 3
        %s217 = smul.addr %s216, 8
        %s218 = scalar_lea.vmem %s0, %s217
        %p219 = pneg %p44
        %p220 = pneg %p41
        %p221 = pneg %p65
        %p222 = pneg %p62
        %p223 = scmp.lt.s32.totalorder %s23, 1
        %s224 = scalar_select %p223, %s23, 1
        %s225 = smul.addr %s224, 8
        %s226 = scalar_lea.vmem %s2, %s225
        %p227 = pneg %p91
        %p228 = pneg %p88
        %p229 = pneg %p117
        %p230 = pneg %p114
        %s231 = sand.u32 %s104, 1
        %s232 = scalar_lea.sflag [#allocation3], %s231
        %s233 = sand.u32 %s104, 1
        %s234 = smul.addr %s233, 8
        %s235 = scalar_lea.vmem [#allocation2], %s234
        %p236 = pneg %p143
        %p237 = pneg %p140
        %s238 = sand.u32 %s23, 1
        %s239 = scalar_lea.sflag [#allocation5], %s238
        %s240 = sand.u32 %s130, 1
        %s241 = smul.addr %s240, 8
        %s242 = scalar_lea.vmem [#allocation4], %s241
        %p243 = pneg %p169
        %p244 = pneg %p166
        %s245 = sand.u32 %s23, 1
        %s246 = scalar_lea.sflag [#allocation5], %s245
        %s247 = sand.u32 %s156, 1
        %s248 = scalar_lea.vmem [#allocation6], %s247
        %s249 = smul.u32 2, %s23
        %p250 = scmp.lt.s32.totalorder %s249, 3
        %s251 = scalar_select %p250, %s249, 3
        %s252 = smul.addr %s251, 8
        %s253 = scalar_lea.vmem %s0, %s252
        %s254 = smul.u32 2, %s23
        %p255 = scmp.lt.s32.totalorder %s23, 1
        %s256 = scalar_select %p255, %s23, 1
        %s257 = smul.addr %s256, 8
        %s258 = scalar_lea.vmem %s2, %s257
        %v259 = vld [vmem:[%s1] sm:$0xff]
        %v260 = vld [vmem:[%s258] sm:$0xff]
        %v261 = vld [vmem:[%s253] sm:$0xff]
        %v262 = vld [vmem:[%s253 + $0x8] sm:$0xff]
        %v263 = vmul.f32 %v261, 0.03
        %v264 = vmul.f32 %v262, 0.03
        %v265 = vmul.f32 %v263, %v261
        %v266 = vmul.f32 %v264, %v262
        %vm267 = vcmask 64512
        %v269 = vsel %vm267, %v259, 0
        %271 = vmatprep.subr.mxu0 0.0
        %272 = vmatpush1.msra.mxu0 %v260
        %273 = vmatprep.subr.mxu0 0.0
        %274 = vmatpush1.msra.mxu0 0.0
        %275 = vmatprep.subr.mxu0 0.0
        %276 = vmatpush1.msra.mxu0 0.0
        %277 = vmatprep.subr.mxu0 0.0
        %278 = vmatpush1.msra.mxu0 0.0
        %279 = vmatprep.subr.mxu0 0.0
        %280 = vmatpush1.msra.mxu0 0.0
        %281 = vmatprep.subr.mxu0 0.0
        %282 = vmatpush1.msra.mxu0 0.0
        %283 = vmatprep.subr.mxu0 0.0
        %284 = vmatpush1.msra.mxu0 0.0
        %285 = vmatprep.subr.mxu0 0.0
        %286 = vmatpush1.msra.mxu0 0.0
        %287 = vmatprep.subr.mxu0 0.0
        %288 = vmatpush1.msra.mxu0 0.0
        %289 = vmatprep.subr.mxu0 0.0
        %290 = vmatpush1.msra.mxu0 0.0
        %291 = vmatprep.subr.mxu0 0.0
        %292 = vmatpush1.msra.mxu0 0.0
        %293 = vmatprep.subr.mxu0 0.0
        %294 = vmatpush1.msra.mxu0 0.0
        %295 = vmatprep.subr.mxu0 0.0
        %296 = vmatpush1.msra.mxu0 0.0
        %297 = vmatprep.subr.mxu0 0.0
        %298 = vmatpush1.msra.mxu0 0.0
        %299 = vmatprep.subr.mxu0 0.0
        %300 = vmatpush1.msra.mxu0 0.0
        %301 = vmatprep.subr.mxu0 0.0
        %302 = vmatpush1.msra.mxu0 0.0
        %303 = vmatprep.subr.mxu0 0.0
        %304 = vmatpush1.msra.mxu0 0.0
        %305 = vmatprep.subr.mxu0 0.0
        %306 = vmatpush1.msra.mxu0 0.0
        %307 = vmatprep.subr.mxu0 0.0
        %308 = vmatpush1.msra.mxu0 0.0
        %309 = vmatprep.subr.mxu0 0.0
        %310 = vmatpush1.msra.mxu0 0.0
        %311 = vmatprep.subr.mxu0 0.0
        %312 = vmatpush1.msra.mxu0 0.0
        %313 = vmatprep.subr.mxu0 0.0
        %314 = vmatpush1.msra.mxu0 0.0
        %315 = vmatprep.subr.mxu0 0.0
        %316 = vmatpush1.msra.mxu0 0.0
        %317 = vmatprep.subr.mxu0 0.0
        %318 = vmatpush1.msra.mxu0 0.0
        %319 = vmatprep.subr.mxu0 0.0
        %320 = vmatpush1.msra.mxu0 0.0
        %321 = vmatprep.subr.mxu0 0.0
        %322 = vmatpush1.msra.mxu0 0.0
        %323 = vmatprep.subr.mxu0 0.0
        %324 = vmatpush1.msra.mxu0 0.0
        %325 = vmatprep.subr.mxu0 0.0
        %326 = vmatpush1.msra.mxu0 0.0
        %327 = vmatprep.subr.mxu0 0.0
        %328 = vmatpush1.msra.mxu0 0.0
        %329 = vmatprep.subr.mxu0 0.0
        %330 = vmatpush1.msra.mxu0 0.0
        %331 = vmatprep.subr.mxu0 0.0
        %332 = vmatpush1.msra.mxu0 0.0
        %333 = vmatprep.subr.mxu0 0.0
        %334 = vmatpush1.msra.mxu0 0.0
        %335 = vmatprep.mubr.f32.mxu0 0.0
        %336 = vmatmul.mubr.f32.gmra.mrb[0].mxu0 %v269
        %v337 = vpop.f32.mrb[0].mxu0
        %v338 = vadd.f32 0.0, %v337
        %v339 = vpop.f32.mrb[0].mxu0
        %340 = vdwg.mxu0
        %v341 = vlaneseq
        %v342 = vand.u32 %v341, 127
        %v343 = vlaneseq
        %v344 = vshrl.u32 %v343, 7
        %v345 = vadd.s32 %v344, 8
        %v346 = vmul.u32 %v344, 8
        %v347 = vmul.u32 %v345, 8
        %vm348 = vcmp.ge.s32.totalorder %v342, %v346
        %vm349 = vcmp.ge.s32.totalorder %v342, %v347
        %v350 = vadd.s32 %v346, 8
        %v351 = vadd.s32 %v347, 8
        %vm352 = vcmp.lt.s32.totalorder %v342, %v350
        %vm353 = vcmp.lt.s32.totalorder %v342, %v351
        %vm354 = vmand %vm348, %vm352
        %vm355 = vmand %vm349, %vm353
        %v356 = vsel %vm354, 1, 0
        %v357 = vsel %vm355, 1, 0
        %v358 = vcvt.s32.f32 %v356
        %v359 = vcvt.s32.f32 %v357
        %360 = vxpose.xlu0.b32.start [1/16] %v265, 128
        %361 = vxpose.xlu0.b32.cont [2/16] %v266, 128
        %362 = vxpose.xlu0.b32.cont [3/16] 0.0, 128
        %363 = vxpose.xlu0.b32.cont [4/16] 0.0, 128
        %364 = vxpose.xlu0.b32.cont [5/16] 0.0, 128
        %365 = vxpose.xlu0.b32.cont [6/16] 0.0, 128
        %366 = vxpose.xlu0.b32.cont [7/16] 0.0, 128
        %367 = vxpose.xlu0.b32.cont [8/16] 0.0, 128
        %368 = vxpose.xlu0.b32.cont [9/16] 0.0, 128
        %369 = vxpose.xlu0.b32.cont [10/16] 0.0, 128
        %370 = vxpose.xlu0.b32.cont [11/16] 0.0, 128
        %371 = vxpose.xlu0.b32.cont [12/16] 0.0, 128
        %372 = vxpose.xlu0.b32.cont [13/16] 0.0, 128
        %373 = vxpose.xlu0.b32.cont [14/16] 0.0, 128
        %374 = vxpose.xlu0.b32.cont [15/16] 0.0, 128
        %375 = vxpose.xlu0.b32.end [16/16] 0.0, 128
        %v376 = vpop.trf.xlu0
        %v377 = vpop.trf.xlu0
        %v378 = vpop.trf.xlu0
        %v379 = vpop.trf.xlu0
        %v380 = vpop.trf.xlu0
        %v381 = vpop.trf.xlu0
        %v382 = vpop.trf.xlu0
        %v383 = vpop.trf.xlu0
        %v384 = vpop.trf.xlu0
        %v385 = vpop.trf.xlu0
        %v386 = vpop.trf.xlu0
        %v387 = vpop.trf.xlu0
        %v388 = vpop.trf.xlu0
        %v389 = vpop.trf.xlu0
        %v390 = vpop.trf.xlu0
        %v391 = vpop.trf.xlu0
        %vm392 = vcmask 130048
        %v394 = vsel %vm392, %v376, 0
        %396 = vmatprep.subr.mxu0 0.0
        %397 = vmatpush1.msra.mxu0 %v358
        %398 = vmatprep.subr.mxu0 0.0
        %399 = vmatpush1.msra.mxu0 %v359
        %400 = vmatprep.subr.mxu0 0.0
        %401 = vmatpush1.msra.mxu0 0.0
        %402 = vmatprep.subr.mxu0 0.0
        %403 = vmatpush1.msra.mxu0 0.0
        %404 = vmatprep.subr.mxu0 0.0
        %405 = vmatpush1.msra.mxu0 0.0
        %406 = vmatprep.subr.mxu0 0.0
        %407 = vmatpush1.msra.mxu0 0.0
        %408 = vmatprep.subr.mxu0 0.0
        %409 = vmatpush1.msra.mxu0 0.0
        %410 = vmatprep.subr.mxu0 0.0
        %411 = vmatpush1.msra.mxu0 0.0
        %412 = vmatprep.subr.mxu0 0.0
        %413 = vmatpush1.msra.mxu0 0.0
        %414 = vmatprep.subr.mxu0 0.0
        %415 = vmatpush1.msra.mxu0 0.0
        %416 = vmatprep.subr.mxu0 0.0
        %417 = vmatpush1.msra.mxu0 0.0
        %418 = vmatprep.subr.mxu0 0.0
        %419 = vmatpush1.msra.mxu0 0.0
        %420 = vmatprep.subr.mxu0 0.0
        %421 = vmatpush1.msra.mxu0 0.0
        %422 = vmatprep.subr.mxu0 0.0
        %423 = vmatpush1.msra.mxu0 0.0
        %424 = vmatprep.subr.mxu0 0.0
        %425 = vmatpush1.msra.mxu0 0.0
        %426 = vmatprep.subr.mxu0 0.0
        %427 = vmatpush1.msra.mxu0 0.0
        %428 = vmatprep.subr.mxu0 0.0
        %429 = vmatpush1.msra.mxu0 0.0
        %430 = vmatprep.subr.mxu0 0.0
        %431 = vmatpush1.msra.mxu0 0.0
        %432 = vmatprep.subr.mxu0 0.0
        %433 = vmatpush1.msra.mxu0 0.0
        %434 = vmatprep.subr.mxu0 0.0
        %435 = vmatpush1.msra.mxu0 0.0
        %436 = vmatprep.subr.mxu0 0.0
        %437 = vmatpush1.msra.mxu0 0.0
        %438 = vmatprep.subr.mxu0 0.0
        %439 = vmatpush1.msra.mxu0 0.0
        %440 = vmatprep.subr.mxu0 0.0
        %441 = vmatpush1.msra.mxu0 0.0
        %442 = vmatprep.subr.mxu0 0.0
        %443 = vmatpush1.msra.mxu0 0.0
        %444 = vmatprep.subr.mxu0 0.0
        %445 = vmatpush1.msra.mxu0 0.0
        %446 = vmatprep.subr.mxu0 0.0
        %447 = vmatpush1.msra.mxu0 0.0
        %448 = vmatprep.subr.mxu0 0.0
        %449 = vmatpush1.msra.mxu0 0.0
        %450 = vmatprep.subr.mxu0 0.0
        %451 = vmatpush1.msra.mxu0 0.0
        %452 = vmatprep.subr.mxu0 0.0
        %453 = vmatpush1.msra.mxu0 0.0
        %454 = vmatprep.subr.mxu0 0.0
        %455 = vmatpush1.msra.mxu0 0.0
        %456 = vmatprep.subr.mxu0 0.0
        %457 = vmatpush1.msra.mxu0 0.0
        %458 = vmatprep.subr.mxu0 0.0
        %459 = vmatpush1.msra.mxu0 0.0
        %460 = vmatprep.mubr.f32.mxu0 0.0
        %461 = vmatmul.mubr.f32.gmra.mrb[0].mxu0 %v394
        %v462 = vpop.f32.mrb[0].mxu0
        %v463 = vadd.f32 0.0, %v462
        %v464 = vpop.f32.mrb[0].mxu0
        %465 = vdwg.mxu0
        %v466 = vmul.f32 %v463, %v260
        %v467 = vsub.f32 %v338, %v466
        %468 = vst [vmem:[%s242] sm:$0xff] %v467
        %vm469 = vcmp.eq.s32.totalorder %v344, %v342
        %v470 = vsel %vm469, 1, 0
        %v471 = vcvt.s32.f32 %v470
        %472 = vrot.lane.b32.xlu0 %v259, 8
        %v473 = vpop.permute.xlu0 %472
        %475 = vrot.lane.b32.xlu0 %v259, 16
        %v476 = vpop.permute.xlu0 %475
        %478 = vrot.lane.b32.xlu0 %v259, 24
        %v479 = vpop.permute.xlu0 %478
        %481 = vrot.lane.b32.xlu0 %v259, 32
        %v482 = vpop.permute.xlu0 %481
        %484 = vrot.lane.b32.xlu0 %v259, 40
        %v485 = vpop.permute.xlu0 %484
        %487 = vrot.lane.b32.xlu0 %v259, 48
        %v488 = vpop.permute.xlu0 %487
        %490 = vrot.lane.b32.xlu0 %v259, 56
        %v491 = vpop.permute.xlu0 %490
        %493 = vrot.lane.b32.xlu0 %v259, 64
        %v494 = vpop.permute.xlu0 %493
        %496 = vrot.lane.b32.xlu0 %v259, 72
        %v497 = vpop.permute.xlu0 %496
        %499 = vrot.lane.b32.xlu0 %v259, 80
        %v500 = vpop.permute.xlu0 %499
        %502 = vrot.lane.b32.xlu0 %v259, 88
        %v503 = vpop.permute.xlu0 %502
        %505 = vrot.lane.b32.xlu0 %v259, 96
        %v506 = vpop.permute.xlu0 %505
        %508 = vrot.lane.b32.xlu0 %v259, 104
        %v509 = vpop.permute.xlu0 %508
        %511 = vrot.lane.b32.xlu0 %v259, 112
        %v512 = vpop.permute.xlu0 %511
        %514 = vrot.lane.b32.xlu0 %v259, 120
        %v515 = vpop.permute.xlu0 %514
        %v517 = vsel %vm267, %v259, %v473
        %v518 = vsel %vm392, %v517, %v476
        %vm519 = vcmask 195584
        %v520 = vsel %vm519, %v518, %v479
        %vm521 = vcmask 261120
        %v522 = vsel %vm521, %v520, %v482
        %vm523 = vcmask 326656
        %v524 = vsel %vm523, %v522, %v485
        %vm525 = vcmask 392192
        %v526 = vsel %vm525, %v524, %v488
        %vm527 = vcmask 457728
        %v528 = vsel %vm527, %v526, %v491
        %vm529 = vcmask 523264
        %v530 = vsel %vm529, %v528, %v494
        %vm531 = vcmask 588800
        %v532 = vsel %vm531, %v530, %v497
        %vm533 = vcmask 654336
        %v534 = vsel %vm533, %v532, %v500
        %vm535 = vcmask 719872
        %v536 = vsel %vm535, %v534, %v503
        %vm537 = vcmask 785408
        %v538 = vsel %vm537, %v536, %v506
        %vm539 = vcmask 850944
        %v540 = vsel %vm539, %v538, %v509
        %vm541 = vcmask 916480
        %v542 = vsel %vm541, %v540, %v512
        %vm543 = vcmask 982016
        %v544 = vsel %vm543, %v542, %v515
        %546 = vrot.lane.b32.xlu0 %v471, 8
        %v547 = vpop.permute.xlu0 %546
        %549 = vrot.lane.b32.xlu0 %v471, 16
        %v550 = vpop.permute.xlu0 %549
        %552 = vrot.lane.b32.xlu0 %v471, 24
        %v553 = vpop.permute.xlu0 %552
        %555 = vrot.lane.b32.xlu0 %v471, 32
        %v556 = vpop.permute.xlu0 %555
        %558 = vrot.lane.b32.xlu0 %v471, 40
        %v559 = vpop.permute.xlu0 %558
        %561 = vrot.lane.b32.xlu0 %v471, 48
        %v562 = vpop.permute.xlu0 %561
        %564 = vrot.lane.b32.xlu0 %v471, 56
        %v565 = vpop.permute.xlu0 %564
        %567 = vrot.lane.b32.xlu0 %v471, 64
        %v568 = vpop.permute.xlu0 %567
        %570 = vrot.lane.b32.xlu0 %v471, 72
        %v571 = vpop.permute.xlu0 %570
        %573 = vrot.lane.b32.xlu0 %v471, 80
        %v574 = vpop.permute.xlu0 %573
        %576 = vrot.lane.b32.xlu0 %v471, 88
        %v577 = vpop.permute.xlu0 %576
        %579 = vrot.lane.b32.xlu0 %v471, 96
        %v580 = vpop.permute.xlu0 %579
        %582 = vrot.lane.b32.xlu0 %v471, 104
        %v583 = vpop.permute.xlu0 %582
        %585 = vrot.lane.b32.xlu0 %v471, 112
        %v586 = vpop.permute.xlu0 %585
        %588 = vrot.lane.b32.xlu0 %v471, 120
        %v589 = vpop.permute.xlu0 %588
        %v591 = vsel %vm267, %v471, %v547
        %v592 = vsel %vm392, %v591, %v550
        %v593 = vsel %vm519, %v592, %v553
        %v594 = vsel %vm521, %v593, %v556
        %v595 = vsel %vm523, %v594, %v559
        %v596 = vsel %vm525, %v595, %v562
        %v597 = vsel %vm527, %v596, %v565
        %v598 = vsel %vm529, %v597, %v568
        %v599 = vsel %vm531, %v598, %v571
        %v600 = vsel %vm533, %v599, %v574
        %v601 = vsel %vm535, %v600, %v577
        %v602 = vsel %vm537, %v601, %v580
        %v603 = vsel %vm539, %v602, %v583
        %v604 = vsel %vm541, %v603, %v586
        %v605 = vsel %vm543, %v604, %v589
        %v606 = vmul.f32 %v605, %v463
        %v607 = vsub.f32 %v544, %v606
        %608 = vst [vmem:[%s235] sm:$0xff] %v607
        %v609 = vmul.f32 %v467, %v467
        %v610 = vrot.slane %v609, 4
        %v611 = vadd.f32 %v609, %v610
        %v612 = vrot.slane %v611, 2
        %v613 = vadd.f32 %v611, %v612
        %v614 = vrot.slane %v613, 1
        %v615 = vadd.f32 %v613, %v614
        %v616 = vmax.f32 %v615, 1e-37
        %v617 = vlog2.pop %v616
        %v618 = vmul.f32 %v617, 0.6931472
        %v619 = vmul.f32 %v618, 0.5
        %620 = vst [vmem:[%s248] sm:$0x1] %v619
        %s621 = sand.u32 %s104, 1
        %s622 = scalar_lea.sflag [#allocation3], %s621
        %s623 = sand.u32 %s104, 1
        %s624 = smul.addr %s623, 8
        %s625 = scalar_lea.vmem [#allocation2], %s624
        %s626 = sand.u32 %s23, 1
        %s627 = scalar_lea.sflag [#allocation5], %s626
        %s628 = sand.u32 %s130, 1
        %s629 = smul.addr %s628, 8
        %s630 = scalar_lea.vmem [#allocation4], %s629
        %s631 = sand.u32 %s23, 1
        %s632 = scalar_lea.sflag [#allocation5], %s631
        %s633 = sand.u32 %s156, 1
        %s634 = scalar_lea.vmem [#allocation6], %s633
        // Predicated region
        $region33: #{tpu_custom_call.1} parent=31 // pred_check
          %p635 = pneg %p114
        $region34: #{tpu_custom_call.1} parent=31 // pred_check_branch
          %637 = sbr.rel (%p635) target = $region36
        $region35: #{tpu_custom_call.1} parent=31 // pred_region
          %s639 = ssub.s32 128, 128
          %640 = vsyncadd %s622, %s639
          %s641 = smul.addr %s23, 128
          %s642 = scalar_lea.hbm %s3, %s641
          %s644 = sshll.u32 %s625, 4
          %s645 = int_to_ptr.vmem [resolvable:$true] %s644
          %647 = dma.vmem_to_hbm [thread:$0]  %s645, 128, %s642, %s622
        $region36: #{tpu_custom_call.1} parent=31 // pred_fallthru
          _
        // Predicated region
        $region37: #{tpu_custom_call.1} parent=31 // pred_check
          %p648 = pneg %p140
        $region38: #{tpu_custom_call.1} parent=31 // pred_check_branch
          %650 = sbr.rel (%p648) target = $region40
        $region39: #{tpu_custom_call.1} parent=31 // pred_region
          %s652 = ssub.s32 128, 128
          %653 = vsyncadd %s627, %s652
          %s654 = smul.addr %s23, 128
          %s655 = scalar_lea.hbm %s4, %s654
          %s657 = sshll.u32 %s630, 4
          %s658 = int_to_ptr.vmem [resolvable:$true] %s657
          %660 = dma.vmem_to_hbm [thread:$0]  %s658, 128, %s655, %s627
        $region40: #{tpu_custom_call.1} parent=31 // pred_fallthru
          _
        // Predicated region
        $region41: #{tpu_custom_call.1} parent=31 // pred_check
          %p661 = pneg %p166
        $region42: #{tpu_custom_call.1} parent=31 // pred_check_branch
          %663 = sbr.rel (%p661) target = $region44
        $region43: #{tpu_custom_call.1} parent=31 // pred_region
          %s665 = ssub.s32 16, 16
          %666 = vsyncadd %s632, %s665
          %s667 = smul.addr %s23, 16
          %s668 = scalar_lea.hbm %s5, %s667
          %s670 = sshll.u32 %s634, 4
          %s671 = int_to_ptr.vmem [resolvable:$true] %s670
          %673 = dma.vmem_to_hbm [thread:$0]  %s671, 16, %s668, %s632
        $region44: #{tpu_custom_call.1} parent=31 // pred_fallthru
          _
      $region32: #{tpu_custom_call.1} parent=5 // pred_fallthru
        _
      %p674 = scmp.le.s32.totalorder 2, %s18
      // Predicated region
      $region45: #{tpu_custom_call.1} parent=5 // pred_check
        %p675 = pneg %p674
      $region46: #{tpu_custom_call.1} parent=5 // pred_check_branch
        %677 = sbr.rel (%p675) target = $region48
      $region47: #{tpu_custom_call.1} parent=5 // pred_region
        %s678 = ssub.s32 %s18, 2
        // Predicated region
        $region49: #{tpu_custom_call.1} parent=47 // pred_check
          %p679 = pneg %p120
        $region50: #{tpu_custom_call.1} parent=47 // pred_check_branch
          %681 = sbr.rel (%p679) target = $region52
        $region51: #{tpu_custom_call.1} parent=47 // pred_region
          %s682 = sand.u32 %s105, 1
          %s683 = scalar_lea.sflag [#allocation3], %s682
          %s684 = sand.u32 %s105, 1
          %s685 = smul.addr %s684, 8
          %s686 = scalar_lea.vmem [#allocation2], %s685
          %687 = dma.done %s683, 128
        $region52: #{tpu_custom_call.1} parent=47 // pred_fallthru
          _
        // Predicated region
        $region53: #{tpu_custom_call.1} parent=47 // pred_check
          %p688 = pneg %p146
        $region54: #{tpu_custom_call.1} parent=47 // pred_check_branch
          %690 = sbr.rel (%p688) target = $region56
        $region55: #{tpu_custom_call.1} parent=47 // pred_region
          %s691 = sand.u32 %s24, 1
          %s692 = scalar_lea.sflag [#allocation5], %s691
          %s693 = sand.u32 %s131, 1
          %s694 = smul.addr %s693, 8
          %s695 = scalar_lea.vmem [#allocation4], %s694
          %696 = dma.done %s692, 128
        $region56: #{tpu_custom_call.1} parent=47 // pred_fallthru
          _
        // Predicated region
        $region57: #{tpu_custom_call.1} parent=47 // pred_check
          %p697 = pneg %p172
        $region58: #{tpu_custom_call.1} parent=47 // pred_check_branch
          %699 = sbr.rel (%p697) target = $region60
        $region59: #{tpu_custom_call.1} parent=47 // pred_region
          %s700 = sand.u32 %s24, 1
          %s701 = scalar_lea.sflag [#allocation5], %s700
          %s702 = sand.u32 %s157, 1
          %s703 = scalar_lea.vmem [#allocation6], %s702
          %704 = dma.done %s701, 16
        $region60: #{tpu_custom_call.1} parent=47 // pred_fallthru
          _
      $region48: #{tpu_custom_call.1} parent=5 // pred_fallthru
        _
    $region6: #{tpu_custom_call.1} parent=1 // loop_footer
      %s22 = sadd.s32 1, %s18
    $region7: #{tpu_custom_call.1} parent=1 // loop_footer_branch
      %17 = sbr.rel target = $region3
    $region8: #{tpu_custom_call.1} parent=1 // loop_exit
      _
    %705 = vsyncpa [#allocation3], 1
    %s706 = scalar_lea.sflag [#allocation3], 1
    %707 = vsyncpa %s706, 1
    %708 = vsyncpa [#allocation5], 1
    %s709 = scalar_lea.sflag [#allocation5], 1
    %710 = vsyncpa %s709, 1

</llo_original>
